<compile_context>
chip_gen: v6e
topology: v6e:2x2x1
jax: 0.10.0
libtpu: 0.0.40
codegen_flags: <defaults>
</compile_context>

<pallas_src>
import functools

import jax
import jax.numpy as jnp
from jax.experimental import pallas as pl
from jax.experimental.pallas import tpu as pltpu


def _hinge_kernel(scores_ref, labels_ref, acc_ref, *, batch, margin, p):
    c = pl.program_id(0)                      # core-split index ("parallel")
    j = pl.program_id(1)                      # batch-tile index ("arbitrary" / reduction)
    tiles_per_core = pl.num_programs(1)

    @pl.when(j == 0)
    def _init():
        acc_ref[...] = jnp.zeros_like(acc_ref)

    scores = scores_ref[...].astype(jnp.float32)          # (TB, C) upcast in-vreg
    labels = labels_ref[...]                               # (TB, 1) int32
    tb, num_classes = scores.shape

    # One-hot of the true class via lane-wise compare (no dynamic gather on TPU).
    col_ids = jax.lax.broadcasted_iota(jnp.int32, (tb, num_classes), 1)
    onehot = col_ids == labels                              # (TB, C) bool

    # Correct-class score per row via masked row reduction.
    output_y = jnp.sum(jnp.where(onehot, scores, 0.0), axis=1, keepdims=True)  # (TB, 1)

    # Global row ids -> mask rows beyond the true batch (ragged last tile / OOB split tile).
    tile_idx = c * tiles_per_core + j
    row_ids = tile_idx * tb + jax.lax.broadcasted_iota(jnp.int32, (tb, 1), 0)
    row_valid = row_ids < batch                              # (TB, 1) bool

    hinge = jnp.maximum(scores - output_y + margin, 0.0)     # (TB, C)

    if p == 1 and margin >= 0:
        # True-class entry of `hinge` is exactly relu(margin) == margin for every valid row,
        # so skip the per-element mask and subtract margin * n_valid instead.
        hinge = jnp.where(row_valid, hinge, 0.0)
        n_valid = jnp.sum(row_valid.astype(jnp.float32))
        tile_sum = jnp.sum(hinge) - margin * n_valid
    else:
        hinge = jnp.where(onehot, 0.0, hinge)
        if p == 2:
            hinge = jnp.square(hinge)
        elif p != 1:
            hinge = hinge ** p
        hinge = jnp.where(row_valid, hinge, 0.0)
        tile_sum = jnp.sum(hinge)

    # Accumulate into the resident lane-dense partial-sum block (broadcast add).
    acc_ref[...] = acc_ref[...] + tile_sum


def _pick_block_rows(batch, num_classes, itemsize):
    # Per pipeline buffer: score rows + lane-padded (128-lane) int32 label rows (~512 B/row).
    # Keep 2x double-buffered tiles comfortably under v5e's 16 MiB default scoped VMEM
    # (and far under v7x's 64 MiB physical VMEM).
    per_row = num_classes * itemsize + 512
    budget = 6 * 1024 * 1024
    tb = budget // per_row
    tb = max(8, min(tb, 8192))
    tb = (tb // 8) * 8
    if tb >= batch:
        tb = batch
    return tb


def multi_class_hinge_loss(output, y, *, p=1, margin=1.0, weight=None,
                           size_average=True, block_rows=None):
    """output: (B, C) float scores (any float dtype), y: (B,) int labels. Returns f32 scalar."""
    if weight is not None:
        # TODO(synk): per-class `weight` tensor not implemented (module default is weight=None).
        raise NotImplementedError("weight is not supported")

    B, C = output.shape
    y2d = y.astype(jnp.int32).reshape(B, 1)
    itemsize = jnp.dtype(output.dtype).itemsize

    tb = block_rows if block_rows is not None else _pick_block_rows(B, C, itemsize)
    tb = min(tb, B)
    if tb < B:
        tb = max(8, (tb // 8) * 8)

    num_tiles = pl.cdiv(B, tb)
    n_split = 2 if num_tiles >= 2 else 1        # both TensorCores on v7x; harmless on 1-TC chips
    tiles_per_core = pl.cdiv(num_tiles, n_split)

    def in_map(c, j):
        # Clamp so a (possibly empty) overshoot tile never starts a fully-OOB DMA; the
        # kernel's row-validity mask (based on the *unclamped* tile index) zeroes it out.
        return (jnp.minimum(c * tiles_per_core + j, num_tiles - 1), 0)

    kernel = functools.partial(_hinge_kernel, batch=B, margin=float(margin), p=p)

    partials = pl.pallas_call(
        kernel,
        out_shape=jax.ShapeDtypeStruct((n_split, 8, 128), jnp.float32),
        grid=(n_split, tiles_per_core),
        in_specs=[
            pl.BlockSpec((tb, C), in_map),      # scores tile, native dtype
            pl.BlockSpec((tb, 1), in_map),      # labels tile (int32 column)
        ],
        out_specs=pl.BlockSpec((1, 8, 128), lambda c, j: (c, 0, 0)),
        compiler_params=pltpu.CompilerParams(
            dimension_semantics=("parallel", "arbitrary")),
        cost_estimate=pl.CostEstimate(
            flops=6 * B * C,
            transcendentals=0,
            bytes_accessed=B * C * itemsize + 4 * B + n_split * 8 * 128 * 4),
    )(output, y2d)

    total = jnp.sum(partials[:, 0, 0])
    if size_average:
        total = total / B
    return total


def _reference(output, y, *, p=1, margin=1.0, size_average=True):
    B, C = output.shape
    output = output.astype(jnp.float32)
    output_y = output[jnp.arange(B), y][:, None]
    loss = output - output_y + margin
    onehot = jax.nn.one_hot(y, C, dtype=bool)
    loss = jnp.where(onehot, 0.0, loss)
    loss = jnp.maximum(loss, 0.0)
    if p != 1:
        loss = loss ** p
    total = jnp.sum(loss)
    if size_average:
        total = total / B
    return total


if __name__ == "__main__":
    key = jax.random.PRNGKey(0)
    k1, k2, k3, k4 = jax.random.split(key, 4)

    # Small case matching the module's typical use (single tile, single core-split).
    B, C = 8, 32
    output = jax.random.normal(k1, (B, C), dtype=jnp.float32)
    y = jax.random.randint(k2, (B,), 0, C, dtype=jnp.int32)

    loss = multi_class_hinge_loss(output, y)
    loss = jax.block_until_ready(loss)
    ref = _reference(output, y)
    assert jnp.allclose(loss, ref, atol=1e-5, rtol=1e-5), (loss, ref)

    # p=2 branch.
    loss2 = jax.block_until_ready(multi_class_hinge_loss(output, y, p=2))
    ref2 = _reference(output, y, p=2)
    assert jnp.allclose(loss2, ref2, atol=1e-5, rtol=1e-5), (loss2, ref2)

    # Multi-tile / 2-way split / ragged-last-tile path (forced small block_rows).
    B2, C2 = 300, 32
    output2 = jax.random.normal(k3, (B2, C2), dtype=jnp.float32)
    y2 = jax.random.randint(k4, (B2,), 0, C2, dtype=jnp.int32)
    loss3 = jax.block_until_ready(multi_class_hinge_loss(output2, y2, block_rows=64))
    ref3 = _reference(output2, y2)
    assert jnp.allclose(loss3, ref3, atol=1e-4, rtol=1e-5), (loss3, ref3)

    print("KERNEL_OK")
</pallas_src>

<mosaic_0001>
module attributes {stable_mosaic.version = 11 : i64} {
  func.func @_hinge_kernel(%arg0: i32, %arg1: i32, %arg2: memref<8x32xf32, #tpu.memory_space<vmem>>, %arg3: memref<8x1xi32, #tpu.memory_space<vmem>>, %arg4: memref<1x8x128xf32, #tpu.memory_space<vmem>>) attributes {dimension_semantics = [#tpu.dimension_semantics<parallel>, #tpu.dimension_semantics<arbitrary>], iteration_bounds = array<i64: 1, 1>, scalar_prefetch = 0 : i64, scratch_operands = 0 : i64, tpu.core_type = #tpu.core_type<tc>, window_params = [{transform_indices = @transform_0, window_bounds = array<i64: 8, 32>}, {transform_indices = @transform_1, window_bounds = array<i64: 8, 1>}, {transform_indices = @transform_2, window_bounds = array<i64: 1, 8, 128>}]} {
    %c0_i32 = arith.constant 0 : i32
    %0 = arith.cmpi eq, %arg1, %c0_i32 : i32
    %1 = arith.extui %0 : i1 to i32
    %c0_i32_0 = arith.constant 0 : i32
    %2 = arith.cmpi ne, %1, %c0_i32_0 : i32
    scf.if %2 {
      %cst_18 = arith.constant 0.000000e+00 : f32
      %46 = vector.broadcast %cst_18 : f32 to vector<1x8x128xf32>
      %c0_19 = arith.constant 0 : index
      %c0_20 = arith.constant 0 : index
      %c0_21 = arith.constant 0 : index
      %47 = vector.load %arg4[%c0_19, %c0_20, %c0_21] : memref<1x8x128xf32, #tpu.memory_space<vmem>>, vector<1x8x128xf32>
      tpu.vector_store %arg4[%c0_19, %c0_20, %c0_21], %46 {strides = array<i32>} : memref<1x8x128xf32, #tpu.memory_space<vmem>>, vector<1x8x128xf32>,
    } else {
    }
    %c0 = arith.constant 0 : index
    %c0_1 = arith.constant 0 : index
    %3 = vector.load %arg2[%c0, %c0_1] : memref<8x32xf32, #tpu.memory_space<vmem>>, vector<8x32xf32>
    %c0_2 = arith.constant 0 : index
    %c0_3 = arith.constant 0 : index
    %4 = vector.load %arg3[%c0_2, %c0_3] : memref<8x1xi32, #tpu.memory_space<vmem>>, vector<8x1xi32>
    %5 = tpu.iota {dimensions = array<i32: 1>} : vector<8x32xi32>
    %6 = vector.broadcast %4 : vector<8x1xi32> to vector<8x32xi32>
    %7 = arith.cmpi eq, %5, %6 : vector<8x32xi32>
    %cst = arith.constant 0.000000e+00 : f32
    %8 = vector.broadcast %cst : f32 to vector<8x32xf32>
    %9 = arith.select %7, %3, %8 : vector<8x32xi1>, vector<8x32xf32>
    %cst_4 = arith.constant dense<0.000000e+00> : vector<8xf32>
    %10 = vector.multi_reduction <add>, %9, %cst_4 [1] : vector<8x32xf32> to vector<8xf32>
    %11 = vector.shape_cast %10 : vector<8xf32> to vector<8x1xf32>
    %c1_i32 = arith.constant 1 : i32
    %12 = arith.muli %arg0, %c1_i32 : i32
    %13 = arith.addi %12, %arg1 : i32
    %c8_i32 = arith.constant 8 : i32
    %14 = arith.muli %13, %c8_i32 : i32
    %15 = tpu.iota {dimensions = array<i32: 0>} : vector<8x1xi32>
    %16 = vector.broadcast %14 : i32 to vector<8x1xi32>
    %17 = arith.addi %16, %15 : vector<8x1xi32>
    %c8_i32_5 = arith.constant 8 : i32
    %18 = vector.broadcast %c8_i32_5 : i32 to vector<8x1xi32>
    %19 = arith.cmpi slt, %17, %18 : vector<8x1xi32>
    %20 = vector.broadcast %11 : vector<8x1xf32> to vector<8x32xf32>
    %21 = arith.subf %3, %20 : vector<8x32xf32>
    %cst_6 = arith.constant 1.000000e+00 : f32
    %22 = vector.broadcast %cst_6 : f32 to vector<8x32xf32>
    %23 = arith.addf %21, %22 : vector<8x32xf32>
    %cst_7 = arith.constant 0.000000e+00 : f32
    %24 = vector.broadcast %cst_7 : f32 to vector<8x32xf32>
    %25 = arith.maximumf %23, %24 : vector<8x32xf32>
    %cst_8 = arith.constant 0.000000e+00 : f32
    %26 = vector.shape_cast %19 : vector<8x1xi1> to vector<8x1xi1>
    %27 = vector.broadcast %26 : vector<8x1xi1> to vector<8x32xi1>
    %28 = vector.broadcast %cst_8 : f32 to vector<8x32xf32>
    %29 = arith.select %27, %25, %28 : vector<8x32xi1>, vector<8x32xf32>
    %30 = arith.extui %19 : vector<8x1xi1> to vector<8x1xi32>
    %31 = arith.sitofp %30 : vector<8x1xi32> to vector<8x1xf32>
    %32 = vector.shape_cast %31 : vector<8x1xf32> to vector<1x8x1xf32>
    %cst_9 = arith.constant dense<0.000000e+00> : vector<1xf32>
    %33 = vector.multi_reduction <add>, %32, %cst_9 [1, 2] : vector<1x8x1xf32> to vector<1xf32>
    %34 = vector.shape_cast %33 : vector<1xf32> to vector<1x1x1xf32>
    %35 = vector.extract %34[0, 0, 0] : f32 from vector<1x1x1xf32>
    %36 = vector.shape_cast %29 : vector<8x32xf32> to vector<1x8x32xf32>
    %cst_10 = arith.constant dense<0.000000e+00> : vector<1xf32>
    %37 = vector.multi_reduction <add>, %36, %cst_10 [1, 2] : vector<1x8x32xf32> to vector<1xf32>
    %38 = vector.shape_cast %37 : vector<1xf32> to vector<1x1x1xf32>
    %39 = vector.extract %38[0, 0, 0] : f32 from vector<1x1x1xf32>
    %cst_11 = arith.constant 1.000000e+00 : f32
    %40 = arith.mulf %cst_11, %35 : f32
    %41 = arith.subf %39, %40 : f32
    %c0_12 = arith.constant 0 : index
    %c0_13 = arith.constant 0 : index
    %c0_14 = arith.constant 0 : index
    %42 = vector.load %arg4[%c0_12, %c0_13, %c0_14] : memref<1x8x128xf32, #tpu.memory_space<vmem>>, vector<1x8x128xf32>
    %43 = vector.broadcast %41 : f32 to vector<1x8x128xf32>
    %44 = arith.addf %42, %43 : vector<1x8x128xf32>
    %c0_15 = arith.constant 0 : index
    %c0_16 = arith.constant 0 : index
    %c0_17 = arith.constant 0 : index
    %45 = vector.load %arg4[%c0_15, %c0_16, %c0_17] : memref<1x8x128xf32, #tpu.memory_space<vmem>>, vector<1x8x128xf32>
    tpu.vector_store %arg4[%c0_15, %c0_16, %c0_17], %44 {strides = array<i32>} : memref<1x8x128xf32, #tpu.memory_space<vmem>>, vector<1x8x128xf32>,
    return
  }
  func.func @transform_0(%arg0: i32, %arg1: i32) -> (i32, i32) {
    %c1_i32 = arith.constant 1 : i32
    %0 = arith.muli %arg0, %c1_i32 : i32
    %1 = arith.addi %0, %arg1 : i32
    %c0_i32 = arith.constant 0 : i32
    %2 = arith.minsi %1, %c0_i32 : i32
    %c0_i32_0 = arith.constant 0 : i32
    %c0_i32_1 = arith.constant 0 : i32
    return %2, %c0_i32_0 : i32, i32
  }
  func.func @transform_1(%arg0: i32, %arg1: i32) -> (i32, i32) {
    %c1_i32 = arith.constant 1 : i32
    %0 = arith.muli %arg0, %c1_i32 : i32
    %1 = arith.addi %0, %arg1 : i32
    %c0_i32 = arith.constant 0 : i32
    %2 = arith.minsi %1, %c0_i32 : i32
    %c0_i32_0 = arith.constant 0 : i32
    %c0_i32_1 = arith.constant 0 : i32
    return %2, %c0_i32_0 : i32, i32
  }
  func.func @transform_2(%arg0: i32, %arg1: i32) -> (i32, i32, i32) {
    %c0_i32 = arith.constant 0 : i32
    %c0_i32_0 = arith.constant 0 : i32
    %c0_i32_1 = arith.constant 0 : i32
    return %arg0, %c0_i32, %c0_i32_0 : i32, i32, i32
  }
}

</mosaic_0001>

<llo_original>
// kernel: tpu_custom_call.1
$region0: #{tpu_custom_call.1}
  #allocation0 [shape = 'u32[]', space=smem, size = 0x4, offset = 0x4, fixed_abs, tag = 'smem constant byte address 0x4 - core index']
  #allocation1 [shape = 'u32[144,128]{1,0:T(1,128)}', space=vmem, size = 0x12000, scoped, tag = 'internal scratch']
  %s0 = inlined_call_operand.vmem [shape: f32[8,32], index: 0, kind: input, shape index: {}]
  %s1 = inlined_call_operand.vmem [shape: s32[8,1], index: 1, kind: input, shape index: {}]
  %s2 = inlined_call_operand.hbm [shape: f32[1,8,128], index: 2, kind: output, shape index: {}]
  %s3 = sld [smem:[#allocation0]]
  $region22: #{tpu_custom_call.1} parent=0
    _
  %s5 = ssub.s32 1, %s3
  %s6 = scalar_select 0, %s5, %s3
  $region1: #{tpu_custom_call.1} parent=0
    #allocation2 [shape = 'u8[4096]{0}', space=vmem, size = 0x1000, scoped, tag = 'output window, operand 0, single buffered']
    #allocation3 [shape = 's32[1]{0}', space=sflag, size = 0x4, scoped, tag = 'scoped memory for tpu_custom_call.1']
    %7 = vsyncpa [#allocation3], 0
    // Predicated region
    $region2: #{tpu_custom_call.1} parent=1 // pred_check
      _
    $region3: #{tpu_custom_call.1} parent=1 // pred_check_branch
      %9 = sbr.rel (0) target = $region5
    $region4: #{tpu_custom_call.1} parent=1 // pred_region
      %s10 = sadd.s32 0, 0
      %p11 = scmp.lt.s32.totalorder %s10, 0
      %s12 = scalar_select %p11, %s10, 0
      %p13 = scmp.lt.s32.totalorder %s12, 0
      %s14 = scalar_select %p13, %s12, 0
      %s15 = smul.addr %s14, 8
      %s16 = scalar_lea.vmem %s0, %s15
      %s17 = sadd.s32 0, 0
      %p18 = scmp.lt.s32.totalorder %s17, 0
      %s19 = scalar_select %p18, %s17, 0
    $region5: #{tpu_custom_call.1} parent=1 // pred_fallthru
      _
    // Predicated region
    $region6: #{tpu_custom_call.1} parent=1 // pred_check
      _
    $region7: #{tpu_custom_call.1} parent=1 // pred_check_branch
      %21 = sbr.rel (0) target = $region9
    $region8: #{tpu_custom_call.1} parent=1 // pred_region
      %s22 = sadd.s32 0, 0
      %p23 = scmp.lt.s32.totalorder %s22, 0
      %s24 = scalar_select %p23, %s22, 0
      %p25 = scmp.lt.s32.totalorder %s24, 0
      %s26 = scalar_select %p25, %s24, 0
      %s27 = smul.addr %s26, 8
      %s28 = scalar_lea.vmem %s1, %s27
      %s29 = sadd.s32 0, 0
      %p30 = scmp.lt.s32.totalorder %s29, 0
      %s31 = scalar_select %p30, %s29, 0
    $region9: #{tpu_custom_call.1} parent=1 // pred_fallthru
      _
    %s32 = sadd.s32 0, 0
    %p33 = scmp.lt.s32.totalorder %s32, 0
    %s34 = scalar_select %p33, %s32, 0
    %p35 = scmp.lt.s32.totalorder %s34, 0
    %s36 = scalar_select %p35, %s34, 0
    %s37 = smul.addr %s36, 8
    %s38 = scalar_lea.vmem %s0, %s37
    %s39 = sadd.s32 0, 0
    %p40 = scmp.lt.s32.totalorder %s39, 0
    %s41 = scalar_select %p40, %s39, 0
    %p42 = scmp.lt.s32.totalorder %s41, 0
    %s43 = scalar_select %p42, %s41, 0
    %s44 = smul.addr %s43, 8
    %s45 = scalar_lea.vmem %s1, %s44
    %s46 = sadd.s32 0, 0
    %p47 = scmp.lt.s32.totalorder %s46, 0
    %s48 = scalar_select %p47, %s46, 0
    %p49 = scmp.lt.s32.totalorder %s48, 0
    %s50 = scalar_select %p49, %s48, 0
    %s51 = smul.addr %s50, 8
    %s52 = scalar_lea.vmem %s0, %s51
    %s53 = sadd.s32 0, 0
    %p54 = scmp.lt.s32.totalorder %s53, 0
    %s55 = scalar_select %p54, %s53, 0
    %s56 = sadd.s32 0, 0
    %p57 = scmp.lt.s32.totalorder %s56, 0
    %s58 = scalar_select %p57, %s56, 0
    %p59 = scmp.lt.s32.totalorder %s58, 0
    %s60 = scalar_select %p59, %s58, 0
    %s61 = smul.addr %s60, 8
    %s62 = scalar_lea.vmem %s1, %s61
    %s63 = sadd.s32 0, 0
    %p64 = scmp.lt.s32.totalorder %s63, 0
    %s65 = scalar_select %p64, %s63, 0
    %p66 = scmp.eq.s32.totalorder 0, 0
    // Predicated region
    $region10: #{tpu_custom_call.1} parent=1 // pred_check
      %p67 = pneg %p66
    $region11: #{tpu_custom_call.1} parent=1 // pred_check_branch
      %69 = sbr.rel (%p67) target = $region13
    $region12: #{tpu_custom_call.1} parent=1 // pred_region
      %70 = vst [vmem:[#allocation2] sm:$0xff] 0.0
    $region13: #{tpu_custom_call.1} parent=1 // pred_fallthru
      _
    %v71 = vld [vmem:[%s52] sm:$0xff]
    %v72 = vld [vmem:[%s62] sm:$0xff]
    %v73 = vlaneseq
    %v74 = vand.u32 %v73, 127
    %75 = vset.pattern.permute.xlu0 0
    %76 = vperm.xlu0 %75, %v72
    %v77 = vpop.permute.xlu0 %76
    %vm78 = vcmp.eq.s32.totalorder %v74, %v77
    %v79 = vsel %vm78, %v71, 0.0
    %vm80 = vcmask 261120
    %v81 = vsel %vm80, %v79, 0.0
    %82 = vadd.xlane.f32.xlu0 %v81
    %v83 = vpop.xlane.xlu0 %82
    %s84 = sadd.s32 0, 0
    %s85 = smul.u32 %s84, 8
    %v86 = vlaneseq
    %v87 = vshrl.u32 %v86, 7
    %v88 = vstv %s85
    %v89 = vadd.s32 %v88, %v87
    %vm90 = vcmp.lt.s32.totalorder %v89, 8
    %v91 = vsub.f32 %v71, %v83
    %v92 = vadd.f32 %v91, 1.0
    %v93 = vmax.f32 %v92, 0.0
    %v94 = vsel %vm90, 1, 0
    %vm95 = vcmp.eq.s32.totalorder %v94, 1
    %v96 = vsel %vm95, %v93, 0.0
    %v97 = vcvt.s32.f32 %v94
    %vm98 = vcmask 7168
    %v99 = vsel %vm98, %v97, 0.0
    %100 = vadd.xlane.f32.xlu0 %v99
    %v101 = vpop.xlane.xlu0 %100
    %v102 = vrot.slane %v101, 4
    %v103 = vadd.f32 %v101, %v102
    %v104 = vrot.slane %v103, 2
    %v105 = vadd.f32 %v103, %v104
    %v106 = vrot.slane %v105, 1
    %v107 = vadd.f32 %v105, %v106
    %s108 = vtos %v107
    %v109 = vsel %vm80, %v96, 0.0
    %110 = vadd.xlane.f32.xlu0 %v109
    %v111 = vpop.xlane.xlu0 %110
    %v112 = vrot.slane %v111, 4
    %v113 = vadd.f32 %v111, %v112
    %v114 = vrot.slane %v113, 2
    %v115 = vadd.f32 %v113, %v114
    %v116 = vrot.slane %v115, 1
    %v117 = vadd.f32 %v115, %v116
    %s118 = vtos %v117
    %s119 = ssub.f32 %s118, %s108
    %v120 = vld [vmem:[#allocation2] sm:$0xff]
    %v121 = vstv %s119
    %v122 = vadd.f32 %v120, %v121
    %123 = vst [vmem:[#allocation2] sm:$0xff] %v122
    // Predicated region
    $region14: #{tpu_custom_call.1} parent=1 // pred_check
      _
    $region15: #{tpu_custom_call.1} parent=1 // pred_check_branch
      %125 = sbr.rel (0) target = $region17
    $region16: #{tpu_custom_call.1} parent=1 // pred_region
      %s127 = ssub.s32 128, 128
      %128 = vsyncadd [#allocation3], %s127
      %s130 = sshll.u32 [#allocation2], 4
      %s131 = int_to_ptr.vmem [resolvable:$true] %s130
      %133 = dma.vmem_to_hbm [thread:$0]  %s131, 128, %s2, [#allocation3]
    $region17: #{tpu_custom_call.1} parent=1 // pred_fallthru
      _
    // Predicated region
    $region18: #{tpu_custom_call.1} parent=1 // pred_check
      _
    $region19: #{tpu_custom_call.1} parent=1 // pred_check_branch
      %135 = sbr.rel (0) target = $region21
    $region20: #{tpu_custom_call.1} parent=1 // pred_region
      %136 = dma.done [#allocation3], 128
    $region21: #{tpu_custom_call.1} parent=1 // pred_fallthru
      _
    %137 = vsyncpa [#allocation3], 1

</llo_original>
